<compile_context>
chip_gen: v6e
topology: v6e:2x2x1
jax: 0.10.0
libtpu: 0.0.40
codegen_flags: <defaults>
</compile_context>

<pallas_src>
import jax
import jax.numpy as jnp
from jax.experimental import pallas as pl
from jax.experimental.pallas import tpu as pltpu


def _alibi_kernel(slopes_ref, out_ref):
    # slopes_ref: SMEM (heads,) float32
    # out_ref:    VMEM (hb, tm, seq) block for (head group g, row tile r)
    g = pl.program_id(0)                       # head-group index ("parallel")
    r = pl.program_id(1)                       # row-tile index   ("parallel")
    hb, tm, n = out_ref.shape

    rows = jax.lax.broadcasted_iota(jnp.int32, (tm, n), 0) + r * tm
    cols = jax.lax.broadcasted_iota(jnp.int32, (tm, n), 1)
    diff = (cols - rows).astype(jnp.float32)   # (j - i), recomputed per step

    for hi in range(hb):                       # hb is static & small (<= heads//2)
        slope = slopes_ref[g * hb + hi]
        out_ref[hi] = (slope * diff).astype(out_ref.dtype)


def _vmem_limits():
    """Returns (vmem_limit_bytes to request, per-output-block byte budget)."""
    try:
        physical = int(pltpu.get_tpu_info().vmem_capacity_bytes)
    except Exception:
        physical = 64 << 20                    # conservative: v7x per-core VMEM
    limit = min(physical // 2, 64 << 20)       # 32 MiB on v7x, 64 MiB on v5e/v6e
    block_budget = max(2 << 20, limit // 2 - (1 << 20))   # double-buffered out tile
    return limit, block_budget


def _choose_tiling(heads, seq_len, out_dtype, block_budget):
    """Returns (hb, tm): heads-per-block and rows-per-block."""
    itemsize = jnp.dtype(out_dtype).itemsize
    sublane = max(8, 32 // max(itemsize, 1))   # 8 f32 / 16 bf16 / 32 int8
    row_bytes = seq_len * itemsize
    plane_bytes = seq_len * row_bytes

    # Row tile: full seq if a whole (seq, seq) plane fits, else the largest
    # sublane-aligned tm whose (tm, seq) slab fits the budget.  The grid uses
    # pl.cdiv, so seq does not need to be divisible by tm (ragged last tile).
    max_rows = max(1, block_budget // max(row_bytes, 1))
    if max_rows >= seq_len:
        tm = seq_len
    else:
        tm = max(sublane, (max_rows // sublane) * sublane)
        tm = min(tm, seq_len)

    # Head blocking (only when a full plane fits): grow hb until each
    # writeback chunk is >= ~4 MiB, but cap at heads // 2 so the head grid
    # axis keeps extent >= 2 (both v7x TensorCores stay busy).
    hb = 1
    if tm == seq_len and heads > 1:
        target = 4 << 20
        max_hb = min(heads // 2, max(1, block_budget // max(plane_bytes, 1)))
        for h in range(1, max_hb + 1):
            if heads % h == 0:
                hb = h
                if h * plane_bytes >= target:
                    break
    return hb, tm


def alibi_mask(x, heads=8, start_ratio=0.5, apply=True, *, _block_budget_bytes=None):
    """Pallas equivalent of AlibiMask.forward."""
    if not apply:
        return None
    _, seq_len, _ = x.shape
    out_dtype = x.dtype
    itemsize = jnp.dtype(out_dtype).itemsize

    # slope per head: start_ratio / 2**h (exact powers of two, deterministic)
    slopes = (start_ratio / (2.0 ** jnp.arange(heads, dtype=jnp.float32))).astype(
        jnp.float32
    )

    vmem_limit, block_budget = _vmem_limits()
    if _block_budget_bytes is not None:        # test hook for the row-tiled path
        block_budget = int(_block_budget_bytes)
    hb, tm = _choose_tiling(heads, seq_len, out_dtype, block_budget)
    grid = (heads // hb, pl.cdiv(seq_len, tm))

    return pl.pallas_call(
        _alibi_kernel,
        out_shape=jax.ShapeDtypeStruct((heads, seq_len, seq_len), out_dtype),
        grid=grid,
        in_specs=[pl.BlockSpec(memory_space=pltpu.MemorySpace.SMEM)],
        out_specs=pl.BlockSpec((hb, tm, seq_len), lambda g, r: (g, r, 0)),
        compiler_params=pltpu.CompilerParams(
            dimension_semantics=("parallel", "parallel"),
            vmem_limit_bytes=vmem_limit,
        ),
        cost_estimate=pl.CostEstimate(
            flops=heads * seq_len * seq_len,
            transcendentals=0,
            bytes_accessed=heads * seq_len * seq_len * itemsize,
        ),
    )(slopes)


def _reference(x, heads=8, start_ratio=0.5):
    _, n, _ = x.shape
    a = jnp.arange(n, dtype=jnp.float32)
    diff = a[None, :] - a[:, None]                      # (n, n): j - i
    c = start_ratio / (2.0 ** jnp.arange(heads, dtype=jnp.float32))
    return (c[:, None, None] * diff[None, :, :]).astype(x.dtype)


if __name__ == "__main__":
    key = jax.random.PRNGKey(0)
    batch, seq, dim, heads = 2, 8, 32, 8
    x = jax.random.normal(key, (batch, seq, dim), dtype=jnp.float32)

    # Small f32 path (matches the module's default usage).
    mask = jax.block_until_ready(alibi_mask(x, heads=heads, start_ratio=0.5))
    ref = _reference(x, heads=heads, start_ratio=0.5)
    assert mask.shape == (heads, seq, seq)
    assert mask.dtype == x.dtype
    assert jnp.array_equal(mask, ref)

    # bf16 (sublane=16) path with head-group blocking.
    xb = x.astype(jnp.bfloat16)
    mb = jax.block_until_ready(alibi_mask(xb, heads=heads, start_ratio=0.5))
    assert mb.dtype == jnp.bfloat16
    assert jnp.array_equal(mb, _reference(xb, heads=heads, start_ratio=0.5))

    # Row-tiled path with an unaligned seq (ragged last row tile), forced via a
    # tiny block budget so the test stays small: tm=64, grid rows = cdiv(100,64)=2.
    seq2 = 100
    x2 = jax.random.normal(key, (1, seq2, dim), dtype=jnp.float32)
    m2 = jax.block_until_ready(
        alibi_mask(x2, heads=heads, start_ratio=0.5, _block_budget_bytes=64 * seq2 * 4)
    )
    assert m2.shape == (heads, seq2, seq2)
    assert jnp.array_equal(m2, _reference(x2, heads=heads, start_ratio=0.5))

    print("KERNEL_OK")
</pallas_src>

<mosaic_0001>
module attributes {stable_mosaic.version = 11 : i64} {
  func.func @_alibi_kernel(%arg0: i32, %arg1: i32, %arg2: memref<8xf32, #tpu.memory_space<smem>>, %arg3: memref<4x8x8xf32, #tpu.memory_space<vmem>>) attributes {dimension_semantics = [#tpu.dimension_semantics<parallel>, #tpu.dimension_semantics<parallel>], iteration_bounds = array<i64: 2, 1>, scalar_prefetch = 0 : i64, scratch_operands = 0 : i64, tpu.core_type = #tpu.core_type<tc>, window_params = [{transform_indices = @transform_0, window_bounds = array<i64: 8>}, {transform_indices = @transform_1, window_bounds = array<i64: 4, 8, 8>}]} {
    %0 = tpu.iota {dimensions = array<i32: 0>} : vector<8x8xi32>
    %c8_i32 = arith.constant 8 : i32
    %1 = arith.muli %arg1, %c8_i32 : i32
    %2 = vector.broadcast %1 : i32 to vector<8x8xi32>
    %3 = arith.addi %0, %2 : vector<8x8xi32>
    %4 = tpu.iota {dimensions = array<i32: 1>} : vector<8x8xi32>
    %5 = arith.subi %4, %3 : vector<8x8xi32>
    %6 = arith.sitofp %5 : vector<8x8xi32> to vector<8x8xf32>
    %c4_i32 = arith.constant 4 : i32
    %7 = arith.muli %arg0, %c4_i32 : i32
    %c0_i32 = arith.constant 0 : i32
    %8 = arith.addi %7, %c0_i32 : i32
    %9 = arith.index_cast %8 : i32 to index
    %10 = memref.load %arg2[%9] : memref<8xf32, #tpu.memory_space<smem>>
    %11 = vector.broadcast %10 : f32 to vector<8x8xf32>
    %12 = arith.mulf %11, %6 : vector<8x8xf32>
    %c0 = arith.constant 0 : index
    %c0_0 = arith.constant 0 : index
    %c0_1 = arith.constant 0 : index
    %13 = vector.load %arg3[%c0, %c0_0, %c0_1] : memref<4x8x8xf32, #tpu.memory_space<vmem>>, vector<1x8x8xf32>
    %14 = vector.shape_cast %13 : vector<1x8x8xf32> to vector<8x8xf32>
    %15 = vector.shape_cast %12 : vector<8x8xf32> to vector<1x8x8xf32>
    tpu.vector_store %arg3[%c0, %c0_0, %c0_1], %15 {strides = array<i32>} : memref<4x8x8xf32, #tpu.memory_space<vmem>>, vector<1x8x8xf32>,
    %c4_i32_2 = arith.constant 4 : i32
    %16 = arith.muli %arg0, %c4_i32_2 : i32
    %c1_i32 = arith.constant 1 : i32
    %17 = arith.addi %16, %c1_i32 : i32
    %18 = arith.index_cast %17 : i32 to index
    %19 = memref.load %arg2[%18] : memref<8xf32, #tpu.memory_space<smem>>
    %20 = vector.broadcast %19 : f32 to vector<8x8xf32>
    %21 = arith.mulf %20, %6 : vector<8x8xf32>
    %c1 = arith.constant 1 : index
    %c0_3 = arith.constant 0 : index
    %c0_4 = arith.constant 0 : index
    %22 = vector.load %arg3[%c1, %c0_3, %c0_4] : memref<4x8x8xf32, #tpu.memory_space<vmem>>, vector<1x8x8xf32>
    %23 = vector.shape_cast %22 : vector<1x8x8xf32> to vector<8x8xf32>
    %24 = vector.shape_cast %21 : vector<8x8xf32> to vector<1x8x8xf32>
    tpu.vector_store %arg3[%c1, %c0_3, %c0_4], %24 {strides = array<i32>} : memref<4x8x8xf32, #tpu.memory_space<vmem>>, vector<1x8x8xf32>,
    %c4_i32_5 = arith.constant 4 : i32
    %25 = arith.muli %arg0, %c4_i32_5 : i32
    %c2_i32 = arith.constant 2 : i32
    %26 = arith.addi %25, %c2_i32 : i32
    %27 = arith.index_cast %26 : i32 to index
    %28 = memref.load %arg2[%27] : memref<8xf32, #tpu.memory_space<smem>>
    %29 = vector.broadcast %28 : f32 to vector<8x8xf32>
    %30 = arith.mulf %29, %6 : vector<8x8xf32>
    %c2 = arith.constant 2 : index
    %c0_6 = arith.constant 0 : index
    %c0_7 = arith.constant 0 : index
    %31 = vector.load %arg3[%c2, %c0_6, %c0_7] : memref<4x8x8xf32, #tpu.memory_space<vmem>>, vector<1x8x8xf32>
    %32 = vector.shape_cast %31 : vector<1x8x8xf32> to vector<8x8xf32>
    %33 = vector.shape_cast %30 : vector<8x8xf32> to vector<1x8x8xf32>
    tpu.vector_store %arg3[%c2, %c0_6, %c0_7], %33 {strides = array<i32>} : memref<4x8x8xf32, #tpu.memory_space<vmem>>, vector<1x8x8xf32>,
    %c4_i32_8 = arith.constant 4 : i32
    %34 = arith.muli %arg0, %c4_i32_8 : i32
    %c3_i32 = arith.constant 3 : i32
    %35 = arith.addi %34, %c3_i32 : i32
    %36 = arith.index_cast %35 : i32 to index
    %37 = memref.load %arg2[%36] : memref<8xf32, #tpu.memory_space<smem>>
    %38 = vector.broadcast %37 : f32 to vector<8x8xf32>
    %39 = arith.mulf %38, %6 : vector<8x8xf32>
    %c3 = arith.constant 3 : index
    %c0_9 = arith.constant 0 : index
    %c0_10 = arith.constant 0 : index
    %40 = vector.load %arg3[%c3, %c0_9, %c0_10] : memref<4x8x8xf32, #tpu.memory_space<vmem>>, vector<1x8x8xf32>
    %41 = vector.shape_cast %40 : vector<1x8x8xf32> to vector<8x8xf32>
    %42 = vector.shape_cast %39 : vector<8x8xf32> to vector<1x8x8xf32>
    tpu.vector_store %arg3[%c3, %c0_9, %c0_10], %42 {strides = array<i32>} : memref<4x8x8xf32, #tpu.memory_space<vmem>>, vector<1x8x8xf32>,
    return
  }
  func.func @transform_0(%arg0: i32, %arg1: i32) -> i32 {
    %c0_i32 = arith.constant 0 : i32
    %c0_i32_0 = arith.constant 0 : i32
    return %c0_i32 : i32
  }
  func.func @transform_1(%arg0: i32, %arg1: i32) -> (i32, i32, i32) {
    %c0_i32 = arith.constant 0 : i32
    %c0_i32_0 = arith.constant 0 : i32
    return %arg0, %arg1, %c0_i32 : i32, i32, i32
  }
}

</mosaic_0001>

<llo_original>
// kernel: tpu_custom_call.1
$region0: #{tpu_custom_call.1}
  #allocation0 [shape = 'u32[]', space=smem, size = 0x4, offset = 0x4, fixed_abs, tag = 'smem constant byte address 0x4 - core index']
  #allocation1 [shape = 'u32[144,128]{1,0:T(1,128)}', space=vmem, size = 0x12000, scoped, tag = 'internal scratch']
  %s0 = inlined_call_operand.hbm [shape: f32[8], index: 0, kind: input, shape index: {}]
  %s1 = inlined_call_operand.hbm [shape: f32[8,8,8], index: 1, kind: output, shape index: {}]
  %s2 = sld [smem:[#allocation0]]
  $region41: #{tpu_custom_call.1} parent=0
    _
  %s4 = ssub.s32 1, %s2
  %s5 = scalar_select 0, %s4, %s2
  $region1: #{tpu_custom_call.1} parent=0
    #allocation2 [shape = 'u8[512]{0}', space=smem, size = 0x200, scoped, tag = 'input window, operand 0, single buffered']
    #allocation3 [shape = 's32[2]{0}', space=sflag, size = 0x8, scoped, tag = 'scoped memory for tpu_custom_call.1']
    #allocation4 [shape = 's32[2]{0}', space=sflag, size = 0x8, scoped, tag = 'scoped memory for tpu_custom_call.1']
    #allocation5 [shape = 'u8[32768]{0}', space=vmem, size = 0x8000, scoped, tag = 'output window, operand 0']
    %6 = vsyncpa [#allocation4], 0
    %7 = vsyncpa [#allocation3], 0
    %s8 = scalar_lea.sflag [#allocation3], 1
    %9 = vsyncpa %s8, 0
    loop: start=0, step=1, limit=4
    $region2: #{tpu_custom_call.1} parent=1 // loop_pre_header
      _
    $region3: #{tpu_custom_call.1} parent=1 // loop_header
      %s11 = sphi 0, %s15
      %p12 = scmp.ge.s32.totalorder %s11, 4
      %s18 = sphi 0, %s30
      %s19 = sphi 0, %s26
      %s20 = sphi 0, %s18
      %s21 = sphi 0, %s19
      %s22 = sphi 0, %s20
      %s23 = sphi 0, %s21
      %s31 = sphi 0, %s31
      %s33 = sphi 0, %s31
      %s34 = sphi 0, %s33
      %s48 = sphi 0, %s34
      %s56 = sphi 0, %s58
      %s59 = sphi 0, %s56
      %s60 = sphi 0, %s59
      %s76 = sphi 0, %s60
    $region4: #{tpu_custom_call.1} parent=1 // loop_header_branch
      %14 = sbr.rel (%p12) target = $region8
    $region5: #{tpu_custom_call.1} parent=1 // loop_body
      %s16 = ssub.s32 %s11, 1
      %s17 = ssub.s32 %s11, 2
      %s24 = sadd.s32 1, %s19
      %p25 = scmp.ge.s32.totalorder %s24, 1
      %s26 = scalar_select %p25, 0, %s24
      %s27 = sadd.s32 1, %s18
      %s28 = scalar_select %p25, %s27, %s18
      %p29 = scmp.ge.s32.totalorder %s28, 2
      %s30 = scalar_select %p29, 0, %s28
      %s32 = sadd.s32 %s31, 1
      %p35 = scmp.eq.s32.totalorder %s11, 1
      %p36 = scmp.ne.s32.totalorder %s31, %s33
      %p37 = scmp.eq.s32.totalorder %s11, 0
      %p38 = por %p36, %p37
      %p39 = scmp.ne.s32.totalorder %s31, %s33
      %p40 = scmp.eq.s32.totalorder %s16, 1
      %p41 = por %p39, %p40
      %p42 = scmp.ne.s32.totalorder %s33, %s34
      %p43 = scmp.eq.s32.totalorder %s16, 0
      %p44 = por %p42, %p43
      %p45 = scmp.ne.s32.totalorder %s33, %s34
      %p46 = scmp.eq.s32.totalorder %s17, 1
      %p47 = por %p45, %p46
      %p49 = scmp.ne.s32.totalorder %s34, %s48
      %p50 = scmp.eq.s32.totalorder %s17, 0
      %p51 = por %p49, %p50
      %s52 = ssub.s32 %s18, %s30
      %s53 = ssub.s32 %s19, %s26
      %s54 = sor.u32 %s52, %s53
      %p55 = scmp.eq.s32.totalorder %s54, 0
      %s57 = sadd.s32 %s56, 1
      %s58 = scalar_select %p55, %s56, %s57
      %p61 = pneg %p55
      %p62 = scmp.eq.s32.totalorder %s11, 1
      %p63 = por %p61, %p62
      %p64 = scmp.ne.s32.totalorder %s56, %s59
      %p65 = scmp.eq.s32.totalorder %s11, 0
      %p66 = por %p64, %p65
      %p67 = scmp.ne.s32.totalorder %s56, %s59
      %p68 = scmp.eq.s32.totalorder %s16, 1
      %p69 = por %p67, %p68
      %p70 = scmp.ne.s32.totalorder %s59, %s60
      %p71 = scmp.eq.s32.totalorder %s16, 0
      %p72 = por %p70, %p71
      %p73 = scmp.ne.s32.totalorder %s59, %s60
      %p74 = scmp.eq.s32.totalorder %s17, 1
      %p75 = por %p73, %p74
      %p77 = scmp.ne.s32.totalorder %s60, %s76
      %p78 = scmp.eq.s32.totalorder %s17, 0
      %p79 = por %p77, %p78
      %p80 = scmp.le.s32.totalorder 1, %s11
      %p81 = scmp.lt.s32.totalorder %s11, 3
      %p82 = pnand %p80, %p81
      %p83 = pneg %p82
      // Predicated region
      $region9: #{tpu_custom_call.1} parent=5 // pred_check
        _
      $region10: #{tpu_custom_call.1} parent=5 // pred_check_branch
        %85 = sbr.rel (%p82) target = $region12
      $region11: #{tpu_custom_call.1} parent=5 // pred_region
        %s86 = ssub.s32 %s11, 1
        // Predicated region
        $region13: #{tpu_custom_call.1} parent=11 // pred_check
          %p87 = pneg %p44
        $region14: #{tpu_custom_call.1} parent=11 // pred_check_branch
          %89 = sbr.rel (%p87) target = $region16
        $region15: #{tpu_custom_call.1} parent=11 // pred_region
          %s91 = ssub.s32 16, 16
          %92 = vsyncadd [#allocation4], %s91
          %95 = dma.hbm_to_smem %s0, 16, [#allocation2], [#allocation4]
        $region16: #{tpu_custom_call.1} parent=11 // pred_fallthru
          _
      $region12: #{tpu_custom_call.1} parent=5 // pred_fallthru
        _
      %p96 = scmp.lt.s32.totalorder %s11, 2
      // Predicated region
      $region17: #{tpu_custom_call.1} parent=5 // pred_check
        %p97 = pneg %p96
      $region18: #{tpu_custom_call.1} parent=5 // pred_check_branch
        %99 = sbr.rel (%p97) target = $region20
      $region19: #{tpu_custom_call.1} parent=5 // pred_region
        _
      $region20: #{tpu_custom_call.1} parent=5 // pred_fallthru
        _
      %p100 = scmp.le.s32.totalorder 1, %s11
      %p101 = scmp.lt.s32.totalorder %s11, 3
      %p102 = pnand %p100, %p101
      %p103 = pneg %p102
      // Predicated region
      $region21: #{tpu_custom_call.1} parent=5 // pred_check
        _
      $region22: #{tpu_custom_call.1} parent=5 // pred_check_branch
        %105 = sbr.rel (%p102) target = $region24
      $region23: #{tpu_custom_call.1} parent=5 // pred_region
        %s106 = ssub.s32 %s11, 1
        // Predicated region
        $region25: #{tpu_custom_call.1} parent=23 // pred_check
          %p107 = pneg %p44
        $region26: #{tpu_custom_call.1} parent=23 // pred_check_branch
          %109 = sbr.rel (%p107) target = $region28
        $region27: #{tpu_custom_call.1} parent=23 // pred_region
          %110 = dma.done [#allocation4], 16
        $region28: #{tpu_custom_call.1} parent=23 // pred_fallthru
          _
        %111 = sfence
        %p112 = pneg %p44
        %p113 = pneg %p41
        %p114 = pneg %p72
        %p115 = pneg %p69
        %s116 = sand.u32 %s59, 1
        %s117 = scalar_lea.sflag [#allocation3], %s116
        %s118 = sand.u32 %s59, 1
        %s119 = smul.addr %s118, 32
        %s120 = scalar_lea.vmem [#allocation5], %s119
        %s121 = smul.u32 4, %s20
        %v122 = vlaneseq
        %v123 = vshrl.u32 %v122, 7
        %s124 = smul.u32 %s21, 8
        %v125 = vstv %s124
        %v126 = vadd.s32 %v123, %v125
        %v127 = vlaneseq
        %v128 = vand.u32 %v127, 127
        %v129 = vsub.s32 %v128, %v126
        %v130 = vcvt.s32.f32 %v129
        %s131 = smul.u32 %s20, 4
        %s132 = sld [smem:[#allocation2 + %s131]]
        %v133 = vstv %s132
        %v134 = vmul.f32 %v133, %v130
        %vm135 = vcmask 64512
        %136 = vst.msk [vmem:[%s120] sm:$0xff] %vm135, %v134
        %s137 = sadd.s32 %s131, 1
        %s138 = sld [smem:[#allocation2 + %s137]]
        %v139 = vstv %s138
        %v140 = vmul.f32 %v139, %v130
        %s141 = scalar_lea.vmem %s120, 8 [#allocation5]
        %142 = vst.msk [vmem:[%s141] sm:$0xff] %vm135, %v140
        %s143 = sadd.s32 %s131, 2
        %s144 = sld [smem:[#allocation2 + %s143]]
        %v145 = vstv %s144
        %v146 = vmul.f32 %v145, %v130
        %s147 = scalar_lea.vmem %s120, 16 [#allocation5]
        %148 = vst.msk [vmem:[%s147] sm:$0xff] %vm135, %v146
        %s149 = sadd.s32 %s131, 3
        %s150 = sld [smem:[#allocation2 + %s149]]
        %v151 = vstv %s150
        %v152 = vmul.f32 %v151, %v130
        %s153 = scalar_lea.vmem %s120, 24 [#allocation5]
        %154 = vst.msk [vmem:[%s153] sm:$0xff] %vm135, %v152
        %s155 = sand.u32 %s59, 1
        %s156 = scalar_lea.sflag [#allocation3], %s155
        %s157 = sand.u32 %s59, 1
        %s158 = smul.addr %s157, 32
        %s159 = scalar_lea.vmem [#allocation5], %s158
        // Predicated region
        $region29: #{tpu_custom_call.1} parent=23 // pred_check
          %p160 = pneg %p69
        $region30: #{tpu_custom_call.1} parent=23 // pred_check_branch
          %162 = sbr.rel (%p160) target = $region32
        $region31: #{tpu_custom_call.1} parent=23 // pred_region
          %s163 = smul.u32 4, %s20
          %s165 = ssub.s32 512, 512
          %166 = vsyncadd %s156, %s165
          %s167 = sadd.s32 %s21, %s163
          %s168 = smul.addr %s167, 128
          %s169 = scalar_lea.hbm %s1, %s168
          %s170 = sshll.u32 %s159, 4
          %s171 = int_to_ptr.vmem [resolvable:$true] %s170
          %176 = dma.vmem_to_hbm [thread:$0]  %s171, 512, %s169, %s156, 128, 128, 8
        $region32: #{tpu_custom_call.1} parent=23 // pred_fallthru
          _
      $region24: #{tpu_custom_call.1} parent=5 // pred_fallthru
        _
      %p177 = scmp.le.s32.totalorder 2, %s11
      // Predicated region
      $region33: #{tpu_custom_call.1} parent=5 // pred_check
        %p178 = pneg %p177
      $region34: #{tpu_custom_call.1} parent=5 // pred_check_branch
        %180 = sbr.rel (%p178) target = $region36
      $region35: #{tpu_custom_call.1} parent=5 // pred_region
        %s181 = ssub.s32 %s11, 2
        // Predicated region
        $region37: #{tpu_custom_call.1} parent=35 // pred_check
          %p182 = pneg %p75
        $region38: #{tpu_custom_call.1} parent=35 // pred_check_branch
          %184 = sbr.rel (%p182) target = $region40
        $region39: #{tpu_custom_call.1} parent=35 // pred_region
          %s185 = sand.u32 %s60, 1
          %s186 = scalar_lea.sflag [#allocation3], %s185
          %s187 = sand.u32 %s60, 1
          %s188 = smul.addr %s187, 32
          %s189 = scalar_lea.vmem [#allocation5], %s188
          %190 = dma.done %s186, 512
        $region40: #{tpu_custom_call.1} parent=35 // pred_fallthru
          _
      $region36: #{tpu_custom_call.1} parent=5 // pred_fallthru
        _
    $region6: #{tpu_custom_call.1} parent=1 // loop_footer
      %s15 = sadd.s32 1, %s11
    $region7: #{tpu_custom_call.1} parent=1 // loop_footer_branch
      %10 = sbr.rel target = $region3
    $region8: #{tpu_custom_call.1} parent=1 // loop_exit
      _
    %191 = vsyncpa [#allocation3], 1
    %s192 = scalar_lea.sflag [#allocation3], 1
    %193 = vsyncpa %s192, 1
    %194 = vsyncpa [#allocation4], 1
    %s195 = scalar_lea.sflag [#allocation4], 1
    %196 = vsyncpa %s195, 1

</llo_original>
